<compile_context>
chip_gen: v6e
topology: v6e:2x2x1
jax: 0.10.0
libtpu: 0.0.40
codegen_flags: <defaults>
</compile_context>

<pallas_src>
import functools

import jax
import jax.numpy as jnp
from jax.experimental import pallas as pl
from jax.experimental.pallas import tpu as pltpu

_LANES = 128           # vreg lane width (last dim lane-dense, unmasked loads)
_MAX_TILE_ROWS = 2048  # 2048 x 128 f32 = 1 MiB per buffer; double-buffered + 1 MiB accumulator
                       # stays far under the scoped VMEM limit on v5e/v6e/v7x.


def _sin_max_kernel(x_ref, o_ref, acc_ref, *, tile_rows, tiles_per_shard, rows, needs_mask):
    s_id = pl.program_id(0)   # shard axis ("parallel", megacore on v7x)
    k = pl.program_id(1)      # tile-within-shard axis ("arbitrary", carries the accumulator)

    @pl.when(k == 0)
    def _init():
        acc_ref[...] = jnp.full(acc_ref.shape, -jnp.inf, jnp.float32)

    # sin in the input dtype (bf16 stays bf16 on the VPU), widen only for the running max.
    s = jnp.sin(x_ref[...]).astype(jnp.float32)

    if needs_mask:
        # Only ragged / overflow tiles take the masked branch; steady state stays elementwise.
        row_start = (s_id * tiles_per_shard + k) * tile_rows
        valid_rows = rows - row_start  # may be <= 0 for fully-overflowing (clamped) tiles

        @pl.when(valid_rows >= tile_rows)
        def _full():
            acc_ref[...] = jnp.maximum(acc_ref[...], s)

        @pl.when(valid_rows < tile_rows)
        def _ragged():
            rid = jax.lax.broadcasted_iota(jnp.int32, s.shape, 0)
            acc_ref[...] = jnp.maximum(acc_ref[...],
                                       jnp.where(rid < valid_rows, s, -jnp.inf))
    else:
        acc_ref[...] = jnp.maximum(acc_ref[...], s)

    @pl.when(k == pl.num_programs(1) - 1)
    def _finalize():
        # Single cross-sublane (XLU) reduce per shard; lane-dense (1,1,128) store.
        o_ref[...] = jnp.max(acc_ref[...], axis=0, keepdims=True).reshape(1, 1, _LANES)


def sin_max(x: jax.Array) -> jax.Array:
    """Pallas TPU equivalent of torch.sin(x).max() for any-rank float input."""
    if x.size == 0:
        raise ValueError("sin_max: empty input (torch.max errors on empty tensors)")
    if not jnp.issubdtype(x.dtype, jnp.floating):
        x = x.astype(jnp.float32)  # torch.sin promotes integer inputs to float
    out_dtype = x.dtype
    n = x.size
    flat = x.reshape(-1)

    # Pad only up to the next 128-lane multiple (<=127 elems; no-op for typical ML shapes).
    # Pad value -pi/2 -> sin == -1, the minimum of sin, so padding can never win the max.
    pad = (-n) % _LANES
    if pad:
        flat = jnp.pad(flat, (0, pad), constant_values=-jnp.pi / 2)
    rows = flat.size // _LANES
    x2d = flat.reshape(rows, _LANES)

    if rows <= _MAX_TILE_ROWS:
        tile_rows = rows            # one full-array block: always layout-legal, no row mask
    else:
        tile_rows = _MAX_TILE_ROWS  # multiple of 8/16/32 -> unmasked packed loads for any dtype

    total_tiles = pl.cdiv(rows, tile_rows)
    num_shards = 2 if total_tiles >= 2 else 1   # both TCs on v7x; harmless loop split elsewhere
    tiles_per_shard = pl.cdiv(total_tiles, num_shards)
    needs_mask = (rows % tile_rows != 0) or (total_tiles % num_shards != 0)

    def in_map(s, k):
        # Clamp overflow tiles (they are fully masked to -inf inside the kernel).
        return (jnp.minimum(s * tiles_per_shard + k, total_tiles - 1), 0)

    kernel = functools.partial(
        _sin_max_kernel,
        tile_rows=tile_rows,
        tiles_per_shard=tiles_per_shard,
        rows=rows,
        needs_mask=needs_mask,
    )

    partial_max = pl.pallas_call(
        kernel,
        out_shape=jax.ShapeDtypeStruct((num_shards, 1, _LANES), jnp.float32),
        grid_spec=pltpu.PrefetchScalarGridSpec(
            num_scalar_prefetch=0,
            grid=(num_shards, tiles_per_shard),
            in_specs=[pl.BlockSpec((tile_rows, _LANES), in_map)],
            out_specs=pl.BlockSpec((1, 1, _LANES), lambda s, k: (s, 0, 0)),
            scratch_shapes=[pltpu.VMEM((tile_rows, _LANES), jnp.float32)],
        ),
        compiler_params=pltpu.CompilerParams(
            dimension_semantics=("parallel", "arbitrary"),
        ),
        cost_estimate=pl.CostEstimate(
            flops=2 * n, transcendentals=n, bytes_accessed=n * x.dtype.itemsize
        ),
    )(x2d)

    # Tiny (num_shards, 1, 128) final reduce + cast back to the input dtype.
    return jnp.max(partial_max).astype(out_dtype)


if __name__ == "__main__":
    key = jax.random.PRNGKey(0)

    # ModuleBasic.get_random_inputs(): torch.randn(100)
    x = jax.random.normal(key, (100,), dtype=jnp.float32)
    out = sin_max(x)
    jax.block_until_ready(out)
    ref = jnp.max(jnp.sin(x))
    assert jnp.allclose(out, ref, atol=1e-6, rtol=1e-6), (out, ref)

    # Extra check exercising the multi-tile / two-shard / ragged-mask path.
    x_big = jax.random.normal(jax.random.PRNGKey(1), (300_000,), dtype=jnp.float32)
    out_big = sin_max(x_big)
    jax.block_until_ready(out_big)
    ref_big = jnp.max(jnp.sin(x_big))
    assert jnp.allclose(out_big, ref_big, atol=1e-6, rtol=1e-6), (out_big, ref_big)

    print("KERNEL_OK")
</pallas_src>

<mosaic_0001>
module attributes {stable_mosaic.version = 11 : i64} {
  func.func @_sin_max_kernel(%arg0: i32, %arg1: i32, %arg2: memref<1x128xf32, #tpu.memory_space<vmem>>, %arg3: memref<1x1x128xf32, #tpu.memory_space<vmem>>, %arg4: memref<1x128xf32, #tpu.memory_space<vmem>>) attributes {dimension_semantics = [#tpu.dimension_semantics<parallel>, #tpu.dimension_semantics<arbitrary>], iteration_bounds = array<i64: 1, 1>, scalar_prefetch = 0 : i64, scratch_operands = 1 : i64, tpu.core_type = #tpu.core_type<tc>, window_params = [{transform_indices = @transform_0, window_bounds = array<i64: 1, 128>}, {transform_indices = @transform_1, window_bounds = array<i64: 1, 1, 128>}]} {
    %c0_i32 = arith.constant 0 : i32
    %0 = arith.cmpi eq, %arg1, %c0_i32 : i32
    %1 = arith.extui %0 : i1 to i32
    %c0_i32_0 = arith.constant 0 : i32
    %2 = arith.cmpi ne, %1, %c0_i32_0 : i32
    scf.if %2 {
      %cst = arith.constant 0xFF800000 : f32
      %11 = vector.broadcast %cst : f32 to vector<1x128xf32>
      %c0_8 = arith.constant 0 : index
      %c0_9 = arith.constant 0 : index
      %12 = vector.load %arg4[%c0_8, %c0_9] : memref<1x128xf32, #tpu.memory_space<vmem>>, vector<1x128xf32>
      tpu.vector_store %arg4[%c0_8, %c0_9], %11 {strides = array<i32>} : memref<1x128xf32, #tpu.memory_space<vmem>>, vector<1x128xf32>,
    } else {
    }
    %c0 = arith.constant 0 : index
    %c0_1 = arith.constant 0 : index
    %3 = vector.load %arg2[%c0, %c0_1] : memref<1x128xf32, #tpu.memory_space<vmem>>, vector<1x128xf32>
    %4 = math.sin %3 : vector<1x128xf32>
    %c0_2 = arith.constant 0 : index
    %c0_3 = arith.constant 0 : index
    %5 = vector.load %arg4[%c0_2, %c0_3] : memref<1x128xf32, #tpu.memory_space<vmem>>, vector<1x128xf32>
    %6 = arith.maximumf %5, %4 : vector<1x128xf32>
    %c0_4 = arith.constant 0 : index
    %c0_5 = arith.constant 0 : index
    %7 = vector.load %arg4[%c0_4, %c0_5] : memref<1x128xf32, #tpu.memory_space<vmem>>, vector<1x128xf32>
    tpu.vector_store %arg4[%c0_4, %c0_5], %6 {strides = array<i32>} : memref<1x128xf32, #tpu.memory_space<vmem>>, vector<1x128xf32>,
    %c0_i32_6 = arith.constant 0 : i32
    %8 = arith.cmpi eq, %arg1, %c0_i32_6 : i32
    %9 = arith.extui %8 : i1 to i32
    %c0_i32_7 = arith.constant 0 : i32
    %10 = arith.cmpi ne, %9, %c0_i32_7 : i32
    scf.if %10 {
      %c0_8 = arith.constant 0 : index
      %c0_9 = arith.constant 0 : index
      %11 = vector.load %arg4[%c0_8, %c0_9] : memref<1x128xf32, #tpu.memory_space<vmem>>, vector<1x128xf32>
      %cst = arith.constant dense<0xFF800000> : vector<128xf32>
      %12 = vector.multi_reduction <maximumf>, %11, %cst [0] : vector<1x128xf32> to vector<128xf32>
      %13 = vector.shape_cast %12 : vector<128xf32> to vector<1x128xf32>
      %14 = vector.shape_cast %13 : vector<1x128xf32> to vector<1x1x128xf32>
      %c0_10 = arith.constant 0 : index
      %c0_11 = arith.constant 0 : index
      %c0_12 = arith.constant 0 : index
      %15 = vector.load %arg3[%c0_10, %c0_11, %c0_12] : memref<1x1x128xf32, #tpu.memory_space<vmem>>, vector<1x1x128xf32>
      tpu.vector_store %arg3[%c0_10, %c0_11, %c0_12], %14 {strides = array<i32>} : memref<1x1x128xf32, #tpu.memory_space<vmem>>, vector<1x1x128xf32>,
    } else {
    }
    return
  }
  func.func @transform_0(%arg0: i32, %arg1: i32) -> (i32, i32) {
    %c1_i32 = arith.constant 1 : i32
    %0 = arith.muli %arg0, %c1_i32 : i32
    %1 = arith.addi %0, %arg1 : i32
    %c0_i32 = arith.constant 0 : i32
    %2 = arith.minsi %1, %c0_i32 : i32
    %c0_i32_0 = arith.constant 0 : i32
    %c0_i32_1 = arith.constant 0 : i32
    return %2, %c0_i32_0 : i32, i32
  }
  func.func @transform_1(%arg0: i32, %arg1: i32) -> (i32, i32, i32) {
    %c0_i32 = arith.constant 0 : i32
    %c0_i32_0 = arith.constant 0 : i32
    %c0_i32_1 = arith.constant 0 : i32
    return %arg0, %c0_i32, %c0_i32_0 : i32, i32, i32
  }
}

</mosaic_0001>

<llo_original>
// kernel: tpu_custom_call.1
$region0: #{tpu_custom_call.1}
  #allocation0 [shape = 'u32[]', space=smem, size = 0x4, offset = 0x4, fixed_abs, tag = 'smem constant byte address 0x4 - core index']
  #allocation1 [shape = 'u32[144,128]{1,0:T(1,128)}', space=vmem, size = 0x12000, scoped, tag = 'internal scratch']
  #allocation2 [shape = 'f32[1,128]{1,0:T(1,128)}', space=vmem, size = 0x200, scoped, tag = 'scratch operand']
  %s0 = inlined_call_operand.hbm [shape: f32[1,128], index: 0, kind: input, shape index: {}]
  %s1 = inlined_call_operand.hbm [shape: f32[1,1,128], index: 1, kind: output, shape index: {}]
  %s2 = sld [smem:[#allocation0]]
  $region26: #{tpu_custom_call.1} parent=0
    _
  %s4 = ssub.s32 1, %s2
  %s5 = scalar_select 0, %s4, %s2
  $region1: #{tpu_custom_call.1} parent=0
    #allocation3 [shape = 'u8[512]{0}', space=vmem, size = 0x400, scoped, tag = 'input window, operand 0, single buffered']
    #allocation4 [shape = 's32[1]{0}', space=sflag, size = 0x4, scoped, tag = 'scoped memory for tpu_custom_call.1']
    #allocation5 [shape = 's32[1]{0}', space=sflag, size = 0x4, scoped, tag = 'scoped memory for tpu_custom_call.1']
    #allocation6 [shape = 'u8[512]{0}', space=vmem, size = 0x400, scoped, tag = 'output window, operand 0, single buffered']
    %6 = vsyncpa [#allocation4], 0
    %7 = vsyncpa [#allocation5], 0
    // Predicated region
    $region2: #{tpu_custom_call.1} parent=1 // pred_check
      _
    $region3: #{tpu_custom_call.1} parent=1 // pred_check_branch
      %9 = sbr.rel (0) target = $region5
    $region4: #{tpu_custom_call.1} parent=1 // pred_region
      %s10 = sadd.s32 0, 0
      %p11 = scmp.lt.s32.totalorder %s10, 0
      %s12 = scalar_select %p11, %s10, 0
      %s14 = ssub.s32 16, 16
      %15 = vsyncadd [#allocation4], %s14
      %s16 = smul.addr %s12, 16
      %s17 = scalar_lea.hbm %s0, %s16
      %s19 = sshll.u32 [#allocation3], 4
      %s20 = int_to_ptr.vmem [resolvable:$true] %s19
      %22 = dma.hbm_to_vmem [thread:$0]  %s17, 16, %s20, [#allocation4]
    $region5: #{tpu_custom_call.1} parent=1 // pred_fallthru
      _
    // Predicated region
    $region6: #{tpu_custom_call.1} parent=1 // pred_check
      _
    $region7: #{tpu_custom_call.1} parent=1 // pred_check_branch
      %24 = sbr.rel (0) target = $region9
    $region8: #{tpu_custom_call.1} parent=1 // pred_region
      %25 = dma.done [#allocation4], 16
    $region9: #{tpu_custom_call.1} parent=1 // pred_fallthru
      _
    %s26 = sadd.s32 0, 0
    %p27 = scmp.lt.s32.totalorder %s26, 0
    %s28 = scalar_select %p27, %s26, 0
    %p29 = scmp.eq.s32.totalorder 0, 0
    // Predicated region
    $region10: #{tpu_custom_call.1} parent=1 // pred_check
      %p30 = pneg %p29
    $region11: #{tpu_custom_call.1} parent=1 // pred_check_branch
      %32 = sbr.rel (%p30) target = $region13
    $region12: #{tpu_custom_call.1} parent=1 // pred_region
      %33 = vst [vmem:[#allocation2] sm:$0x1] -inf
    $region13: #{tpu_custom_call.1} parent=1 // pred_fallthru
      _
    %v34 = vld [vmem:[#allocation3] sm:$0x1]
    %v35 = vand.u32 2147483647, %v34
    %vm36 = vcmp.le.f32.partialorder %v35, 0.7853982
    %vm37 = vcmp.lt.s32.totalorder %v34, 0
    %v38 = vand.u32 %v34, 2139095040
    %v39 = vshrl.u32 %v38, 23
    %v40 = vsub.s32 %v39, 127
    %v41 = vand.u32 2147483647, %v34
    %v42 = vand.u32 %v41, 8388607
    %v43 = vor.u32 %v42, 8388608
    %v44 = vsub.s32 0, %v43
    %v45 = vadd.s32 %v40, 1
    %vm46 = vcmp.gt.s32.totalorder %v45, 0
    %v47 = vsel %vm46, %v45, 0
    %v48 = vshrl.u32 %v47, 5
    %v49 = vand.u32 %v47, 31
    %v50 = vsub.s32 32, %v49
    %v51 = vshrl.u32 683565275, %v50
    %v52 = vshll.u32 683565275, %v49
    %v53 = vshrl.u32 2475754826, %v50
    %v54 = vor.u32 %v52, %v53
    %v55 = vshll.u32 2475754826, %v49
    %v56 = vshrl.u32 2131351028, %v50
    %v57 = vor.u32 %v55, %v56
    %v58 = vshll.u32 2131351028, %v49
    %v59 = vshrl.u32 2102212464, %v50
    %v60 = vor.u32 %v58, %v59
    %v61 = vshll.u32 2102212464, %v49
    %v62 = vshrl.u32 920167782, %v50
    %v63 = vor.u32 %v61, %v62
    %v64 = vshll.u32 920167782, %v49
    %v65 = vshrl.u32 1326507024, %v50
    %v66 = vor.u32 %v64, %v65
    %vm67 = vcmp.lt.s32.totalorder %v48, 1
    %vm68 = vcmp.lt.s32.totalorder %v48, 2
    %vm69 = vcmp.lt.s32.totalorder %v48, 3
    %vm70 = vcmp.lt.s32.totalorder %v48, 4
    %v71 = vsel %vm67, %v51, %v54
    %v72 = vsel %vm70, %v60, 2102212464
    %v73 = vsel %vm69, %v57, %v72
    %v74 = vsel %vm68, %v71, %v73
    %v75 = vsel %vm67, %v54, %v57
    %v76 = vsel %vm70, %v63, 920167782
    %v77 = vsel %vm69, %v60, %v76
    %v78 = vsel %vm68, %v75, %v77
    %v79 = vsel %vm67, %v57, %v60
    %v80 = vsel %vm70, %v66, 1326507024
    %v81 = vsel %vm69, %v63, %v80
    %v82 = vsel %vm68, %v79, %v81
    %v83 = vshll.u32 %v43, 8
    %v84 = vmul.u32.u64.compose %v83, %v82
    %v85 = vextract.low.u32 %v84
    %v86 = vextract.high.u32 %v84
    %v87 = vmul.u32.u64.compose %v83, %v78
    %v88 = vextract.low.u32 %v87
    %v89 = vextract.high.u32 %v87
    %v90 = vmul.u32 %v83, %v74
    %v91 = vadd.s32 %v86, %v88
    %vm92 = vc.u32 %v86, %v88
    %v93 = vadd.s32 %v89, 1
    %v94 = vsel %vm92, %v93, %v89
    %v95 = vadd.s32 %v90, %v94
    %v96 = vadd.s32 %v95, 536870912
    %v97 = vshrl.u32 %v96, 30
    %v98 = vshll.u32 %v97, 30
    %v99 = vsub.s32 %v95, %v98
    %vm100 = vcmp.lt.s32.totalorder %v99, 0
    %v101 = vsub.s32 0, %v99
    %v102 = vsel %vm100, %v101, %v99
    %v103 = vclz %v102
    %v104 = vsub.s32 %v103, 2
    %vm105 = vcmp.gt.s32.totalorder 0, %v104
    %v106 = vsel %vm105, 0, %v104
    %v107 = vsub.s32 32, %v106
    %v108 = vshll.u32 %v99, %v106
    %v109 = vshrl.u32 %v91, %v107
    %v110 = vor.u32 %v108, %v109
    %v111 = vsub.s32 4294967266, %v106
    %v112 = vadd.s32 %v111, 127
    %v113 = vshll.u32 %v112, 23
    %v114 = vor.u32 4788187, %v113
    %v115 = vand.u32 2147483647, %v114
    %v117 = vcvt.s32.f32 %v110
    %v118 = vmul.f32 %v117, %v115
    %v119 = vxor.u32 %v118, 2147483648
    %v120 = vsel %vm37, %v119, %v118
    %v121 = vsub.s32 4, %v97
    %v122 = vsel %vm37, %v121, %v97
    %v123 = vsel %vm36, %v34, %v120
    %v124 = vsel %vm36, 0, %v122
    %v125 = vcosq.f32.pop %v123
    %v126 = vsinq.f32.pop %v123
    %vm127 = vweird.f32 %v34
    %v128 = vadd.s32 %v124, 3
    %v129 = vand.u32 %v128, 3
    %vm130 = vcmp.lt.s32.totalorder %v129, 2
    %vm131 = vcmp.eq.s32.totalorder %v129, 0
    %v132 = vxor.u32 %v126, 2147483648
    %v133 = vsel %vm131, %v125, %v132
    %vm134 = vcmp.eq.s32.totalorder %v129, 2
    %v135 = vxor.u32 %v125, 2147483648
    %v136 = vsel %vm134, %v135, %v126
    %v137 = vsel %vm130, %v133, %v136
    %v138 = vsel %vm127, nan, %v137
    %v139 = vld [vmem:[#allocation2] sm:$0x1]
    %v140 = vmax.f32 %v139, %v138
    %141 = vst [vmem:[#allocation2] sm:$0x1] %v140
    // Predicated region
    $region14: #{tpu_custom_call.1} parent=1 // pred_check
      %p142 = pneg %p29
    $region15: #{tpu_custom_call.1} parent=1 // pred_check_branch
      %144 = sbr.rel (%p142) target = $region17
    $region16: #{tpu_custom_call.1} parent=1 // pred_region
      %v145 = vld [vmem:[#allocation2] sm:$0x1]
      %146 = vst [vmem:[#allocation6] sm:$0x1] %v145
    $region17: #{tpu_custom_call.1} parent=1 // pred_fallthru
      _
    // Predicated region
    $region18: #{tpu_custom_call.1} parent=1 // pred_check
      _
    $region19: #{tpu_custom_call.1} parent=1 // pred_check_branch
      %148 = sbr.rel (0) target = $region21
    $region20: #{tpu_custom_call.1} parent=1 // pred_region
      %s150 = ssub.s32 16, 16
      %151 = vsyncadd [#allocation5], %s150
      %s153 = sshll.u32 [#allocation6], 4
      %s154 = int_to_ptr.vmem [resolvable:$true] %s153
      %156 = dma.vmem_to_hbm [thread:$0]  %s154, 16, %s1, [#allocation5]
    $region21: #{tpu_custom_call.1} parent=1 // pred_fallthru
      _
    // Predicated region
    $region22: #{tpu_custom_call.1} parent=1 // pred_check
      _
    $region23: #{tpu_custom_call.1} parent=1 // pred_check_branch
      %158 = sbr.rel (0) target = $region25
    $region24: #{tpu_custom_call.1} parent=1 // pred_region
      %159 = dma.done [#allocation5], 16
    $region25: #{tpu_custom_call.1} parent=1 // pred_fallthru
      _
    %160 = vsyncpa [#allocation4], 1
    %161 = vsyncpa [#allocation5], 1

</llo_original>
